<compile_context>
chip_gen: v6e
topology: v6e:2x2x1
jax: 0.10.0
libtpu: 0.0.40
codegen_flags: <defaults>
</compile_context>

<pallas_src>
import functools

import jax
import jax.numpy as jnp
from jax import lax
from jax.experimental import pallas as pl
from jax.experimental.pallas import tpu as pltpu


def _round_up(x, m):
    return (x + m - 1) // m * m


# -----------------------------------------------------------------------------
# Kernel 1: tiled power iteration -> spectral scale = lip_const * gamma / sigma.
# Grid: (pow_iter, Ip // ti); Wt row-block (ti, Op) per step; one pass over Wt
# per power iteration (v-normalization factored out by linearity).
# -----------------------------------------------------------------------------
def _sigma_scale_kernel(wt_ref, u_ref, g_ref, scale_ref, u_new_ref,
                        u_scr, wv_scr, sv_scr, *, lip_const, eps):
    t = pl.program_id(0)     # power-iteration index
    ib = pl.program_id(1)    # row-block of Wt (padded-I axis)

    @pl.when((t == 0) & (ib == 0))
    def _():
        u_scr[...] = u_ref[...]                      # (1, Op) f32

    @pl.when(ib == 0)
    def _():
        wv_scr[...] = jnp.zeros_like(wv_scr)
        sv_scr[...] = jnp.zeros_like(sv_scr)

    # Reductions in f32 even when Wt is stored in bf16.
    w = wt_ref[...].astype(jnp.float32)              # (ti, Op)
    u_row = u_scr[...]                               # (1, Op)
    vu = jnp.sum(w * u_row, axis=1, keepdims=True)   # (ti, 1)  = Wt_blk @ u
    wv_scr[...] += jnp.sum(w * vu, axis=0, keepdims=True)   # += Wt_blk^T @ vu
    sv_scr[...] += jnp.sum(vu * vu, keepdims=True)          # += ||vu_blk||^2

    @pl.when(ib == pl.num_programs(1) - 1)
    def _():
        cv = lax.rsqrt(sv_scr[...] + eps)            # (1,1): 1/sqrt(||u@W||^2+eps)
        wv = wv_scr[...] * cv                        # (1,Op) == W @ l2_normalize(u @ W)
        s = jnp.sum(wv * wv, keepdims=True)          # (1,1)
        inv = lax.rsqrt(s + eps)
        u_new = wv * inv                             # l2_normalize(wv)
        u_scr[...] = u_new                           # feed next power iteration

        @pl.when(t == pl.num_programs(0) - 1)
        def _():
            sigma = s * inv                          # u_new . wv   (1,1)
            scale_ref[...] = (lip_const * g_ref[...]) / sigma
            u_new_ref[...] = u_new


# -----------------------------------------------------------------------------
# Kernel 2: tiled GEMM  y = (x @ Wt) * scale + b  with K-accumulation.
# -----------------------------------------------------------------------------
def _snlinear_gemm_kernel(scale_ref, x_ref, wt_ref, b_ref, o_ref, acc_ref):
    @pl.when(pl.program_id(2) == 0)
    def _():
        acc_ref[...] = jnp.zeros_like(acc_ref)

    # (tm, tk) @ (tk, tn) -> f32 accumulate on the MXU (canonical orientation).
    acc_ref[...] += jnp.dot(x_ref[...], wt_ref[...],
                            preferred_element_type=jnp.float32)

    @pl.when(pl.program_id(2) == pl.num_programs(2) - 1)
    def _():
        o_ref[...] = (acc_ref[...] * scale_ref[...] + b_ref[...]).astype(o_ref.dtype)


# -----------------------------------------------------------------------------
# Wrapper
# -----------------------------------------------------------------------------
def sn_linear(x, weight, u, bias, gamma, *, pow_iter=1, lip_const=1.0,
              eps=1e-12, tm=256, tn=512, tk=1024, compute_dtype=None,
              return_u_new=False):
    assert pow_iter >= 1
    f32 = jnp.float32
    O, I = weight.shape
    assert x.shape[-1] == I
    lead = x.shape[:-1]
    x2 = x.reshape(-1, I)
    B = x2.shape[0]

    out_dtype = x2.dtype
    cdt = jnp.dtype(compute_dtype) if compute_dtype is not None else jnp.dtype(x2.dtype)
    itemsize = cdt.itemsize

    # ---- tile sizes: lane-dense 128-aligned N/K, 8-aligned M --------------
    # (On v6e with 128 MiB VMEM tk/tn can be pushed further; defaults fit the
    #  32 MiB scoped limit on every generation.)
    tm = min(tm, _round_up(B, 8))
    tn = min(tn, _round_up(O, 128))
    tk = min(tk, _round_up(I, 128))
    # v7x megacore: if the M axis collapses to one tile, keep >=2 tiles along N.
    if _round_up(B, tm) == tm and O > 128:
        tn = min(tn, max(128, (_round_up(O, 128) // 2) // 128 * 128))
    Bp, Op, Ip = _round_up(B, tm), _round_up(O, tn), _round_up(I, tk)

    # ---- operands: one padded/transposed W per call, fast-path when aligned.
    # (Weight prep is static per training step and can be hoisted by the caller.)
    if (B, I) == (Bp, Ip) and jnp.dtype(x2.dtype) == cdt:
        x_p = x2
    else:
        x_p = jnp.zeros((Bp, Ip), cdt).at[:B, :I].set(x2.astype(cdt))

    w_t = weight.astype(cdt).T                      # (I, O) in compute dtype
    if (I, O) == (Ip, Op):
        w_t_p = w_t
    else:
        w_t_p = jnp.zeros((Ip, Op), cdt).at[:I, :O].set(w_t)

    b_p = jnp.zeros((1, Op), f32)
    if bias is not None:
        b_p = b_p.at[0, :O].set(bias.astype(f32))

    if O == Op:
        u_p = u.reshape(1, O).astype(f32)
    else:
        u_p = jnp.zeros((1, Op), f32).at[0, :O].set(u.astype(f32))

    g_p = (jnp.ones((1, 1), f32) if gamma is None
           else jnp.asarray(gamma, f32).reshape(1, 1))

    # --- 1) spectral scale via tiled power iteration -------------------------
    ti = 8
    for cand in (512, 256, 128, 64, 32, 16, 8):
        if Ip % cand == 0 and cand * Op * itemsize <= (4 << 20):
            ti = cand
            break
    # TODO(synk): if even a (8, Op) row block exceeds VMEM (enormous O), tile the
    # power iteration along the output axis as well.
    n_ib = Ip // ti
    sig_need = 2 * ti * Op * itemsize + 4 * Op * 4 + (1 << 20)
    sig_vmem = int(min(max(2 * sig_need, 8 << 20), 48 << 20))

    scale11, u_new_p = pl.pallas_call(
        functools.partial(_sigma_scale_kernel, lip_const=float(lip_const),
                          eps=float(eps)),
        out_shape=(jax.ShapeDtypeStruct((1, 1), f32),
                   jax.ShapeDtypeStruct((1, Op), f32)),
        grid_spec=pltpu.PrefetchScalarGridSpec(
            num_scalar_prefetch=0,
            grid=(int(pow_iter), n_ib),
            in_specs=[
                pl.BlockSpec((ti, Op), lambda t, i: (i, 0)),    # Wt row block
                pl.BlockSpec((1, Op), lambda t, i: (0, 0)),     # u (resident)
                pl.BlockSpec((1, 1), lambda t, i: (0, 0)),      # gamma
            ],
            out_specs=(pl.BlockSpec((1, 1), lambda t, i: (0, 0)),
                       pl.BlockSpec((1, Op), lambda t, i: (0, 0))),
            scratch_shapes=[pltpu.VMEM((1, Op), f32),    # u state
                            pltpu.VMEM((1, Op), f32),    # wv accumulator
                            pltpu.VMEM((1, 1), f32)],    # ||u@W||^2 accumulator
        ),
        compiler_params=pltpu.CompilerParams(
            dimension_semantics=("arbitrary", "arbitrary"),
            vmem_limit_bytes=sig_vmem,
        ),
    )(w_t_p, u_p, g_p)

    # --- 2) tiled GEMM with epilogue-fused scale + bias ----------------------
    grid = (Bp // tm, Op // tn, Ip // tk)
    out_isize = jnp.dtype(out_dtype).itemsize
    gemm_need = (2 * (tm * tk + tk * tn) * itemsize + 2 * tn * 4
                 + 2 * tm * tn * out_isize + tm * tn * 4)
    gemm_vmem = int(min(max(2 * gemm_need, 16 << 20), 48 << 20))

    out_p = pl.pallas_call(
        _snlinear_gemm_kernel,
        out_shape=jax.ShapeDtypeStruct((Bp, Op), out_dtype),
        grid_spec=pltpu.PrefetchScalarGridSpec(
            num_scalar_prefetch=0,
            grid=grid,
            in_specs=[
                pl.BlockSpec((1, 1), lambda i, j, k: (0, 0)),    # scale (resident)
                pl.BlockSpec((tm, tk), lambda i, j, k: (i, k)),  # x
                pl.BlockSpec((tk, tn), lambda i, j, k: (k, j)),  # Wt
                pl.BlockSpec((1, tn), lambda i, j, k: (0, j)),   # bias
            ],
            out_specs=pl.BlockSpec((tm, tn), lambda i, j, k: (i, j)),
            scratch_shapes=[pltpu.VMEM((tm, tn), jnp.float32)],
        ),
        compiler_params=pltpu.CompilerParams(
            dimension_semantics=("parallel", "parallel", "arbitrary"),
            vmem_limit_bytes=gemm_vmem,
        ),
        cost_estimate=pl.CostEstimate(
            flops=2 * Bp * Ip * Op,
            transcendentals=0,
            bytes_accessed=(Bp * Ip * itemsize + Ip * Op * itemsize
                            + Bp * Op * out_isize + Op * 4)),
    )(scale11, x_p, w_t_p, b_p)

    out = out_p[:B, :O].reshape(*lead, O)
    if return_u_new:
        return out, u_new_p[0, :O]   # updated power-iteration buffer
    return out


# -----------------------------------------------------------------------------
# Pure-JAX reference of SNLinear.forward
# -----------------------------------------------------------------------------
def sn_linear_ref(x, weight, u, bias, gamma, *, pow_iter=1, lip_const=1.0,
                  eps=1e-12):
    def l2n(t):
        return t / jnp.sqrt(jnp.sum(t * t) + eps)
    uu = u
    for _ in range(pow_iter - 1):
        v = l2n(uu @ weight)
        uu = l2n(weight @ v)
    v = l2n(uu @ weight)
    wv = weight @ v
    u_new = l2n(wv)
    sigma = u_new @ wv
    w_bar = lip_const * weight / sigma
    if gamma is not None:
        w_bar = gamma[0] * w_bar
    y = x @ w_bar.T
    if bias is not None:
        y = y + bias
    return y


if __name__ == "__main__":
    B, IN, OUT = 8, 32, 16
    key = jax.random.PRNGKey(0)
    k_w, k_u, k_x = jax.random.split(key, 3)

    # kaiming_normal_(a=0, mode='fan_in') -> std = sqrt(2 / in_features)
    weight = jax.random.normal(k_w, (OUT, IN), jnp.float32) * jnp.sqrt(2.0 / IN)
    bias = jnp.zeros((OUT,), jnp.float32)            # nn.Parameter(torch.zeros)
    u = jax.random.normal(k_u, (OUT,), jnp.float32)  # register_buffer torch.randn
    gamma = jnp.ones((1,), jnp.float32)              # use_gamma=True, init ones
    x = jax.random.normal(k_x, (B, IN), jnp.float32)

    # f32 path (matches the torch module's default dtype)
    out = jax.block_until_ready(
        sn_linear(x, weight, u, bias, gamma, pow_iter=1, lip_const=1.0))
    ref = sn_linear_ref(x, weight, u, bias, gamma, pow_iter=1, lip_const=1.0)
    assert out.shape == (B, OUT)
    assert jnp.allclose(out, ref, atol=1e-4, rtol=1e-4), \
        f"f32 max diff {jnp.max(jnp.abs(out - ref))}"

    # multi-step power iteration exercises the (pow_iter, K-blocks) sigma grid
    out2 = jax.block_until_ready(
        sn_linear(x, weight, u, bias, gamma, pow_iter=3, lip_const=1.0))
    ref2 = sn_linear_ref(x, weight, u, bias, gamma, pow_iter=3, lip_const=1.0)
    assert jnp.allclose(out2, ref2, atol=1e-4, rtol=1e-4), \
        f"pow_iter=3 max diff {jnp.max(jnp.abs(out2 - ref2))}"

    # bf16 compute path (native MXU dtype; halves W HBM/VMEM traffic)
    out_bf = jax.block_until_ready(
        sn_linear(x, weight, u, bias, gamma, pow_iter=1, lip_const=1.0,
                  compute_dtype=jnp.bfloat16))
    assert out_bf.shape == (B, OUT)
    assert jnp.allclose(out_bf.astype(jnp.float32), ref, atol=1e-1, rtol=1e-1), \
        f"bf16 max diff {jnp.max(jnp.abs(out_bf.astype(jnp.float32) - ref))}"

    print("KERNEL_OK")
</pallas_src>

<mosaic_0001>
module attributes {stable_mosaic.version = 11 : i64} {
  func.func @_sigma_scale_kernel(%arg0: i32, %arg1: i32, %arg2: memref<128x128xf32, #tpu.memory_space<vmem>>, %arg3: memref<1x128xf32, #tpu.memory_space<vmem>>, %arg4: memref<1x1xf32, #tpu.memory_space<vmem>>, %arg5: memref<1x1xf32, #tpu.memory_space<vmem>>, %arg6: memref<1x128xf32, #tpu.memory_space<vmem>>, %arg7: memref<1x128xf32, #tpu.memory_space<vmem>>, %arg8: memref<1x128xf32, #tpu.memory_space<vmem>>, %arg9: memref<1x1xf32, #tpu.memory_space<vmem>>) attributes {dimension_semantics = [#tpu.dimension_semantics<arbitrary>, #tpu.dimension_semantics<arbitrary>], iteration_bounds = array<i64: 1, 1>, scalar_prefetch = 0 : i64, scratch_operands = 3 : i64, tpu.core_type = #tpu.core_type<tc>, window_params = [{transform_indices = @transform_0, window_bounds = array<i64: 128, 128>}, {pipeline_mode = #tpu.pipeline_mode<synchronous>, transform_indices = @transform_1, window_bounds = array<i64: 1, 128>}, {pipeline_mode = #tpu.pipeline_mode<synchronous>, transform_indices = @transform_2, window_bounds = array<i64: 1, 1>}, {pipeline_mode = #tpu.pipeline_mode<synchronous>, transform_indices = @transform_3, window_bounds = array<i64: 1, 1>}, {pipeline_mode = #tpu.pipeline_mode<synchronous>, transform_indices = @transform_4, window_bounds = array<i64: 1, 128>}]} {
    %c0_i32 = arith.constant 0 : i32
    %0 = arith.cmpi eq, %arg0, %c0_i32 : i32
    %c0_i32_0 = arith.constant 0 : i32
    %1 = arith.cmpi eq, %arg1, %c0_i32_0 : i32
    %2 = arith.andi %0, %1 : i1
    %3 = arith.extui %2 : i1 to i32
    %c0_i32_1 = arith.constant 0 : i32
    %4 = arith.cmpi ne, %3, %c0_i32_1 : i32
    scf.if %4 {
      %c0_19 = arith.constant 0 : index
      %c0_20 = arith.constant 0 : index
      %33 = vector.load %arg3[%c0_19, %c0_20] : memref<1x128xf32, #tpu.memory_space<vmem>>, vector<1x128xf32>
      %c0_21 = arith.constant 0 : index
      %c0_22 = arith.constant 0 : index
      %34 = vector.load %arg7[%c0_21, %c0_22] : memref<1x128xf32, #tpu.memory_space<vmem>>, vector<1x128xf32>
      tpu.vector_store %arg7[%c0_21, %c0_22], %33 {strides = array<i32>} : memref<1x128xf32, #tpu.memory_space<vmem>>, vector<1x128xf32>,
    } else {
    }
    %c0_i32_2 = arith.constant 0 : i32
    %5 = arith.cmpi eq, %arg1, %c0_i32_2 : i32
    %6 = arith.extui %5 : i1 to i32
    %c0_i32_3 = arith.constant 0 : i32
    %7 = arith.cmpi ne, %6, %c0_i32_3 : i32
    scf.if %7 {
      %cst_19 = arith.constant 0.000000e+00 : f32
      %33 = vector.broadcast %cst_19 : f32 to vector<1x128xf32>
      %c0_20 = arith.constant 0 : index
      %c0_21 = arith.constant 0 : index
      %34 = vector.load %arg8[%c0_20, %c0_21] : memref<1x128xf32, #tpu.memory_space<vmem>>, vector<1x128xf32>
      tpu.vector_store %arg8[%c0_20, %c0_21], %33 {strides = array<i32>} : memref<1x128xf32, #tpu.memory_space<vmem>>, vector<1x128xf32>,
      %cst_22 = arith.constant 0.000000e+00 : f32
      %35 = vector.broadcast %cst_22 : f32 to vector<1x1xf32>
      %c0_23 = arith.constant 0 : index
      %c0_24 = arith.constant 0 : index
      %36 = vector.load %arg9[%c0_23, %c0_24] : memref<1x1xf32, #tpu.memory_space<vmem>>, vector<1x1xf32>
      tpu.vector_store %arg9[%c0_23, %c0_24], %35 {strides = array<i32>} : memref<1x1xf32, #tpu.memory_space<vmem>>, vector<1x1xf32>,
    } else {
    }
    %c0 = arith.constant 0 : index
    %c0_4 = arith.constant 0 : index
    %8 = vector.load %arg2[%c0, %c0_4] : memref<128x128xf32, #tpu.memory_space<vmem>>, vector<128x128xf32>
    %c0_5 = arith.constant 0 : index
    %c0_6 = arith.constant 0 : index
    %9 = vector.load %arg7[%c0_5, %c0_6] : memref<1x128xf32, #tpu.memory_space<vmem>>, vector<1x128xf32>
    %10 = vector.broadcast %9 : vector<1x128xf32> to vector<128x128xf32>
    %11 = arith.mulf %8, %10 : vector<128x128xf32>
    %cst = arith.constant dense<0.000000e+00> : vector<128xf32>
    %12 = vector.multi_reduction <add>, %11, %cst [1] : vector<128x128xf32> to vector<128xf32>
    %13 = vector.shape_cast %12 : vector<128xf32> to vector<128x1xf32>
    %c0_7 = arith.constant 0 : index
    %c0_8 = arith.constant 0 : index
    %14 = vector.load %arg8[%c0_7, %c0_8] : memref<1x128xf32, #tpu.memory_space<vmem>>, vector<1x128xf32>
    %15 = vector.broadcast %13 : vector<128x1xf32> to vector<128x128xf32>
    %16 = arith.mulf %8, %15 : vector<128x128xf32>
    %cst_9 = arith.constant dense<0.000000e+00> : vector<128xf32>
    %17 = vector.multi_reduction <add>, %16, %cst_9 [0] : vector<128x128xf32> to vector<128xf32>
    %18 = vector.shape_cast %17 : vector<128xf32> to vector<1x128xf32>
    %19 = arith.addf %14, %18 : vector<1x128xf32>
    %c0_10 = arith.constant 0 : index
    %c0_11 = arith.constant 0 : index
    %20 = vector.load %arg8[%c0_10, %c0_11] : memref<1x128xf32, #tpu.memory_space<vmem>>, vector<1x128xf32>
    tpu.vector_store %arg8[%c0_10, %c0_11], %19 {strides = array<i32>} : memref<1x128xf32, #tpu.memory_space<vmem>>, vector<1x128xf32>,
    %c0_12 = arith.constant 0 : index
    %c0_13 = arith.constant 0 : index
    %21 = vector.load %arg9[%c0_12, %c0_13] : memref<1x1xf32, #tpu.memory_space<vmem>>, vector<1x1xf32>
    %22 = arith.mulf %13, %13 : vector<128x1xf32>
    %23 = vector.shape_cast %22 : vector<128x1xf32> to vector<1x128x1xf32>
    %cst_14 = arith.constant dense<0.000000e+00> : vector<1xf32>
    %24 = vector.multi_reduction <add>, %23, %cst_14 [1, 2] : vector<1x128x1xf32> to vector<1xf32>
    %25 = vector.shape_cast %24 : vector<1xf32> to vector<1x1x1xf32>
    %26 = vector.extract %25[0, 0, 0] : f32 from vector<1x1x1xf32>
    %27 = vector.broadcast %26 : f32 to vector<1x1xf32>
    %28 = arith.addf %21, %27 : vector<1x1xf32>
    %c0_15 = arith.constant 0 : index
    %c0_16 = arith.constant 0 : index
    %29 = vector.load %arg9[%c0_15, %c0_16] : memref<1x1xf32, #tpu.memory_space<vmem>>, vector<1x1xf32>
    tpu.vector_store %arg9[%c0_15, %c0_16], %28 {strides = array<i32>} : memref<1x1xf32, #tpu.memory_space<vmem>>, vector<1x1xf32>,
    %c0_i32_17 = arith.constant 0 : i32
    %30 = arith.cmpi eq, %arg1, %c0_i32_17 : i32
    %31 = arith.extui %30 : i1 to i32
    %c0_i32_18 = arith.constant 0 : i32
    %32 = arith.cmpi ne, %31, %c0_i32_18 : i32
    scf.if %32 {
      %c0_19 = arith.constant 0 : index
      %c0_20 = arith.constant 0 : index
      %33 = vector.load %arg9[%c0_19, %c0_20] : memref<1x1xf32, #tpu.memory_space<vmem>>, vector<1x1xf32>
      %cst_21 = arith.constant 9.99999996E-13 : f32
      %34 = vector.broadcast %cst_21 : f32 to vector<1x1xf32>
      %35 = arith.addf %33, %34 : vector<1x1xf32>
      %36 = math.rsqrt %35 : vector<1x1xf32>
      %c0_22 = arith.constant 0 : index
      %c0_23 = arith.constant 0 : index
      %37 = vector.load %arg8[%c0_22, %c0_23] : memref<1x128xf32, #tpu.memory_space<vmem>>, vector<1x128xf32>
      %38 = vector.broadcast %36 : vector<1x1xf32> to vector<1x128xf32>
      %39 = arith.mulf %37, %38 : vector<1x128xf32>
      %40 = arith.mulf %39, %39 : vector<1x128xf32>
      %41 = vector.shape_cast %40 : vector<1x128xf32> to vector<1x1x128xf32>
      %cst_24 = arith.constant dense<0.000000e+00> : vector<1xf32>
      %42 = vector.multi_reduction <add>, %41, %cst_24 [1, 2] : vector<1x1x128xf32> to vector<1xf32>
      %43 = vector.shape_cast %42 : vector<1xf32> to vector<1x1x1xf32>
      %44 = vector.extract %43[0, 0, 0] : f32 from vector<1x1x1xf32>
      %45 = vector.broadcast %44 : f32 to vector<1x1xf32>
      %cst_25 = arith.constant 9.99999996E-13 : f32
      %46 = vector.broadcast %cst_25 : f32 to vector<1x1xf32>
      %47 = arith.addf %45, %46 : vector<1x1xf32>
      %48 = math.rsqrt %47 : vector<1x1xf32>
      %49 = vector.broadcast %48 : vector<1x1xf32> to vector<1x128xf32>
      %50 = arith.mulf %39, %49 : vector<1x128xf32>
      %c0_26 = arith.constant 0 : index
      %c0_27 = arith.constant 0 : index
      %51 = vector.load %arg7[%c0_26, %c0_27] : memref<1x128xf32, #tpu.memory_space<vmem>>, vector<1x128xf32>
      tpu.vector_store %arg7[%c0_26, %c0_27], %50 {strides = array<i32>} : memref<1x128xf32, #tpu.memory_space<vmem>>, vector<1x128xf32>,
      %c0_i32_28 = arith.constant 0 : i32
      %52 = arith.cmpi eq, %arg0, %c0_i32_28 : i32
      %53 = arith.extui %52 : i1 to i32
      %c0_i32_29 = arith.constant 0 : i32
      %54 = arith.cmpi ne, %53, %c0_i32_29 : i32
      scf.if %54 {
        %55 = arith.mulf %45, %48 : vector<1x1xf32>
        %c0_30 = arith.constant 0 : index
        %c0_31 = arith.constant 0 : index
        %56 = vector.load %arg4[%c0_30, %c0_31] : memref<1x1xf32, #tpu.memory_space<vmem>>, vector<1x1xf32>
        %cst_32 = arith.constant 1.000000e+00 : f32
        %57 = vector.broadcast %cst_32 : f32 to vector<1x1xf32>
        %58 = arith.mulf %57, %56 : vector<1x1xf32>
        %59 = arith.divf %58, %55 : vector<1x1xf32>
        %c0_33 = arith.constant 0 : index
        %c0_34 = arith.constant 0 : index
        %60 = vector.load %arg5[%c0_33, %c0_34] : memref<1x1xf32, #tpu.memory_space<vmem>>, vector<1x1xf32>
        tpu.vector_store %arg5[%c0_33, %c0_34], %59 {strides = array<i32>} : memref<1x1xf32, #tpu.memory_space<vmem>>, vector<1x1xf32>,
        %c0_35 = arith.constant 0 : index
        %c0_36 = arith.constant 0 : index
        %61 = vector.load %arg6[%c0_35, %c0_36] : memref<1x128xf32, #tpu.memory_space<vmem>>, vector<1x128xf32>
        tpu.vector_store %arg6[%c0_35, %c0_36], %50 {strides = array<i32>} : memref<1x128xf32, #tpu.memory_space<vmem>>, vector<1x128xf32>,
      } else {
      }
    } else {
    }
    return
  }
  func.func @transform_0(%arg0: i32, %arg1: i32) -> (i32, i32) {
    %c0_i32 = arith.constant 0 : i32
    %c0_i32_0 = arith.constant 0 : i32
    return %arg1, %c0_i32 : i32, i32
  }
  func.func @transform_1(%arg0: i32, %arg1: i32) -> (i32, i32) {
    %c0_i32 = arith.constant 0 : i32
    %c0_i32_0 = arith.constant 0 : i32
    %c0_i32_1 = arith.constant 0 : i32
    return %c0_i32, %c0_i32_0 : i32, i32
  }
  func.func @transform_2(%arg0: i32, %arg1: i32) -> (i32, i32) {
    %c0_i32 = arith.constant 0 : i32
    %c0_i32_0 = arith.constant 0 : i32
    %c0_i32_1 = arith.constant 0 : i32
    return %c0_i32, %c0_i32_0 : i32, i32
  }
  func.func @transform_3(%arg0: i32, %arg1: i32) -> (i32, i32) {
    %c0_i32 = arith.constant 0 : i32
    %c0_i32_0 = arith.constant 0 : i32
    %c0_i32_1 = arith.constant 0 : i32
    return %c0_i32, %c0_i32_0 : i32, i32
  }
  func.func @transform_4(%arg0: i32, %arg1: i32) -> (i32, i32) {
    %c0_i32 = arith.constant 0 : i32
    %c0_i32_0 = arith.constant 0 : i32
    %c0_i32_1 = arith.constant 0 : i32
    return %c0_i32, %c0_i32_0 : i32, i32
  }
}

</mosaic_0001>

<llo_original>
// kernel: tpu_custom_call.1
$region0: #{tpu_custom_call.1}
  #allocation0 [shape = 'u32[]', space=smem, size = 0x4, offset = 0x4, fixed_abs, tag = 'smem constant byte address 0x4 - core index']
  #allocation1 [shape = 'u32[144,128]{1,0:T(1,128)}', space=vmem, size = 0x12000, scoped, tag = 'internal scratch']
  #allocation2 [shape = 'f32[1,128]{1,0:T(1,128)}', space=vmem, size = 0x200, scoped, tag = 'scratch operand']
  #allocation3 [shape = 'f32[1,128]{1,0:T(1,128)}', space=vmem, size = 0x200, scoped, tag = 'scratch operand']
  #allocation4 [shape = 'f32[1,1]{1,0:T(1,128)}', space=vmem, size = 0x200, scoped, tag = 'scratch operand']
  #allocation5 [shape = 'f32[1,1]{1,0:T(1,128)S(1)}', space=vmem, size = 0x200, scoped, tag = 'scoped memory for tpu_custom_call.1']
  %s0 = inlined_call_operand.hbm [shape: f32[128,128], index: 0, kind: input, shape index: {}]
  %s1 = inlined_call_operand.vmem [shape: f32[1,128], index: 1, kind: input, shape index: {}]
  %s2 = inlined_call_operand.<no memory space> [shape: f32[1,1], index: 2, kind: input, shape index: {}]
  %s3 = inlined_call_operand.hbm [shape: f32[1,1], index: 3, kind: output, shape index: {0}]
  %s4 = inlined_call_operand.hbm [shape: f32[1,128], index: 4, kind: output, shape index: {1}]
  %5 = xla_tuple %s3, %s4
  %s6 = sld [smem:[#allocation0]]
  $region50: #{tpu_custom_call.1} parent=0
    _
  %s8 = ssub.s32 1, %s6
  %s9 = scalar_select 0, %s8, %s6
  %v10 = vstv %s2
  %11 = vst [vmem:[#allocation5] sm:$0x1] %v10
  $region1: #{tpu_custom_call.1} parent=0
    #allocation6 [shape = 'u8[65536]{0}', space=vmem, size = 0x10000, scoped, tag = 'input window, operand 0, single buffered']
    #allocation7 [shape = 's32[1]{0}', space=sflag, size = 0x4, scoped, tag = 'scoped memory for tpu_custom_call.1']
    #allocation8 [shape = 's32[1]{0}', space=sflag, size = 0x4, scoped, tag = 'scoped memory for tpu_custom_call.1']
    #allocation9 [shape = 'u8[512]{0}', space=vmem, size = 0x400, scoped, tag = 'output window, operand 0, single buffered']
    #allocation10 [shape = 'u8[512]{0}', space=vmem, size = 0x400, scoped, tag = 'output window, operand 1, single buffered']
    #allocation11 [shape = 's32[1]{0}', space=sflag, size = 0x4, scoped, tag = 'scoped memory for tpu_custom_call.1']
    %12 = vsyncpa [#allocation7], 0
    %13 = vsyncpa [#allocation8], 0
    %14 = vsyncpa [#allocation11], 0
    // Predicated region
    $region2: #{tpu_custom_call.1} parent=1 // pred_check
      _
    $region3: #{tpu_custom_call.1} parent=1 // pred_check_branch
      %16 = sbr.rel (0) target = $region5
    $region4: #{tpu_custom_call.1} parent=1 // pred_region
      %s18 = ssub.s32 2048, 2048
      %19 = vsyncadd [#allocation7], %s18
      %s20 = sshll.u32 [#allocation6], 4
      %s21 = int_to_ptr.vmem [resolvable:$true] %s20
      %26 = dma.hbm_to_vmem [thread:$0]  %s0, 2048, %s21, [#allocation7], 128, 128, 8
    $region5: #{tpu_custom_call.1} parent=1 // pred_fallthru
      _
    // Predicated region
    $region6: #{tpu_custom_call.1} parent=1 // pred_check
      _
    $region7: #{tpu_custom_call.1} parent=1 // pred_check_branch
      %28 = sbr.rel (0) target = $region9
    $region8: #{tpu_custom_call.1} parent=1 // pred_region
      _
    $region9: #{tpu_custom_call.1} parent=1 // pred_fallthru
      _
    // Predicated region
    $region10: #{tpu_custom_call.1} parent=1 // pred_check
      _
    $region11: #{tpu_custom_call.1} parent=1 // pred_check_branch
      %30 = sbr.rel (0) target = $region13
    $region12: #{tpu_custom_call.1} parent=1 // pred_region
      _
    $region13: #{tpu_custom_call.1} parent=1 // pred_fallthru
      _
    // Predicated region
    $region14: #{tpu_custom_call.1} parent=1 // pred_check
      _
    $region15: #{tpu_custom_call.1} parent=1 // pred_check_branch
      %32 = sbr.rel (0) target = $region17
    $region16: #{tpu_custom_call.1} parent=1 // pred_region
      %33 = dma.done [#allocation7], 2048
    $region17: #{tpu_custom_call.1} parent=1 // pred_fallthru
      _
    %p34 = scmp.eq.s32.totalorder 0, 0
    %p35 = scmp.eq.s32.totalorder 0, 0
    %p36 = pnand %p34, %p35
    %p37 = pneg %p36
    // Predicated region
    $region18: #{tpu_custom_call.1} parent=1 // pred_check
      _
    $region19: #{tpu_custom_call.1} parent=1 // pred_check_branch
      %39 = sbr.rel (%p36) target = $region21
    $region20: #{tpu_custom_call.1} parent=1 // pred_region
      %v40 = vld [vmem:[%s1] sm:$0x1]
      %41 = vst [vmem:[#allocation2] sm:$0x1] %v40
    $region21: #{tpu_custom_call.1} parent=1 // pred_fallthru
      _
    // Predicated region
    $region22: #{tpu_custom_call.1} parent=1 // pred_check
      %p42 = pneg %p35
    $region23: #{tpu_custom_call.1} parent=1 // pred_check_branch
      %44 = sbr.rel (%p42) target = $region25
    $region24: #{tpu_custom_call.1} parent=1 // pred_region
      %45 = vst [vmem:[#allocation3] sm:$0x1] 0.0
      %vm46 = vcmask 0
      %47 = vst.msk [vmem:[#allocation4] sm:$0x1] %vm46, 0.0
    $region25: #{tpu_custom_call.1} parent=1 // pred_fallthru
      _
    %v48 = vld [vmem:[#allocation6] sm:$0xff]
    %v49 = vld [vmem:[#allocation6 + $0x8] sm:$0xff]
    %v50 = vld [vmem:[#allocation6 + $0x10] sm:$0xff]
    %v51 = vld [vmem:[#allocation6 + $0x18] sm:$0xff]
    %v52 = vld [vmem:[#allocation6 + $0x20] sm:$0xff]
    %v53 = vld [vmem:[#allocation6 + $0x28] sm:$0xff]
    %v54 = vld [vmem:[#allocation6 + $0x30] sm:$0xff]
    %v55 = vld [vmem:[#allocation6 + $0x38] sm:$0xff]
    %v56 = vld [vmem:[#allocation6 + $0x40] sm:$0xff]
    %v57 = vld [vmem:[#allocation6 + $0x48] sm:$0xff]
    %v58 = vld [vmem:[#allocation6 + $0x50] sm:$0xff]
    %v59 = vld [vmem:[#allocation6 + $0x58] sm:$0xff]
    %v60 = vld [vmem:[#allocation6 + $0x60] sm:$0xff]
    %v61 = vld [vmem:[#allocation6 + $0x68] sm:$0xff]
    %v62 = vld [vmem:[#allocation6 + $0x70] sm:$0xff]
    %v63 = vld [vmem:[#allocation6 + $0x78] sm:$0xff]
    %v64 = vld [vmem:[#allocation2] sm:$0x1]
    %v66 = vlaneseq
    %v67 = vshrl.u32 %v66, 7
    %v68 = vsub.s32 0, %v67
    %v69 = vrot.slane %v64, %v68
    %v71 = vmul.f32 %v48, %v69
    %v72 = vmul.f32 %v49, %v69
    %v73 = vmul.f32 %v50, %v69
    %v74 = vmul.f32 %v51, %v69
    %v75 = vmul.f32 %v52, %v69
    %v76 = vmul.f32 %v53, %v69
    %v77 = vmul.f32 %v54, %v69
    %v78 = vmul.f32 %v55, %v69
    %v79 = vmul.f32 %v56, %v69
    %v80 = vmul.f32 %v57, %v69
    %v81 = vmul.f32 %v58, %v69
    %v82 = vmul.f32 %v59, %v69
    %v83 = vmul.f32 %v60, %v69
    %v84 = vmul.f32 %v61, %v69
    %v85 = vmul.f32 %v62, %v69
    %v86 = vmul.f32 %v63, %v69
    %87 = vadd.xlane.f32.xlu0 %v71
    %v88 = vpop.xlane.xlu0 %87
    %89 = vadd.xlane.f32.xlu0 %v72
    %v90 = vpop.xlane.xlu0 %89
    %91 = vadd.xlane.f32.xlu0 %v73
    %v92 = vpop.xlane.xlu0 %91
    %93 = vadd.xlane.f32.xlu0 %v74
    %v94 = vpop.xlane.xlu0 %93
    %95 = vadd.xlane.f32.xlu0 %v75
    %v96 = vpop.xlane.xlu0 %95
    %97 = vadd.xlane.f32.xlu0 %v76
    %v98 = vpop.xlane.xlu0 %97
    %99 = vadd.xlane.f32.xlu0 %v77
    %v100 = vpop.xlane.xlu0 %99
    %101 = vadd.xlane.f32.xlu0 %v78
    %v102 = vpop.xlane.xlu0 %101
    %103 = vadd.xlane.f32.xlu0 %v79
    %v104 = vpop.xlane.xlu0 %103
    %105 = vadd.xlane.f32.xlu0 %v80
    %v106 = vpop.xlane.xlu0 %105
    %107 = vadd.xlane.f32.xlu0 %v81
    %v108 = vpop.xlane.xlu0 %107
    %109 = vadd.xlane.f32.xlu0 %v82
    %v110 = vpop.xlane.xlu0 %109
    %111 = vadd.xlane.f32.xlu0 %v83
    %v112 = vpop.xlane.xlu0 %111
    %113 = vadd.xlane.f32.xlu0 %v84
    %v114 = vpop.xlane.xlu0 %113
    %115 = vadd.xlane.f32.xlu0 %v85
    %v116 = vpop.xlane.xlu0 %115
    %117 = vadd.xlane.f32.xlu0 %v86
    %v118 = vpop.xlane.xlu0 %117
    %v119 = vld [vmem:[#allocation3] sm:$0x1]
    %v120 = vmul.f32 %v48, %v88
    %v121 = vmul.f32 %v49, %v90
    %v122 = vmul.f32 %v50, %v92
    %v123 = vmul.f32 %v51, %v94
    %v124 = vmul.f32 %v52, %v96
    %v125 = vmul.f32 %v53, %v98
    %v126 = vmul.f32 %v54, %v100
    %v127 = vmul.f32 %v55, %v102
    %v128 = vmul.f32 %v56, %v104
    %v129 = vmul.f32 %v57, %v106
    %v130 = vmul.f32 %v58, %v108
    %v131 = vmul.f32 %v59, %v110
    %v132 = vmul.f32 %v60, %v112
    %v133 = vmul.f32 %v61, %v114
    %v134 = vmul.f32 %v62, %v116
    %v135 = vmul.f32 %v63, %v118
    %v136 = vadd.f32 %v120, %v121
    %v137 = vadd.f32 %v136, %v122
    %v138 = vadd.f32 %v137, %v123
    %v139 = vadd.f32 %v138, %v124
    %v140 = vadd.f32 %v139, %v125
    %v141 = vadd.f32 %v140, %v126
    %v142 = vadd.f32 %v141, %v127
    %v143 = vadd.f32 %v142, %v128
    %v144 = vadd.f32 %v143, %v129
    %v145 = vadd.f32 %v144, %v130
    %v146 = vadd.f32 %v145, %v131
    %v147 = vadd.f32 %v146, %v132
    %v148 = vadd.f32 %v147, %v133
    %v149 = vadd.f32 %v148, %v134
    %v150 = vadd.f32 %v149, %v135
    %v151 = vrot.slane %v150, 4
    %v152 = vadd.f32 %v150, %v151
    %v153 = vrot.slane %v152, 2
    %v154 = vadd.f32 %v152, %v153
    %v155 = vrot.slane %v154, 1
    %v156 = vadd.f32 %v154, %v155
    %v157 = vadd.f32 %v119, %v156
    %158 = vst [vmem:[#allocation3] sm:$0x1] %v157
    %v159 = vld [vmem:[#allocation4] sm:$0x1]
    %v160 = vmul.f32 %v88, %v88
    %v161 = vmul.f32 %v90, %v90
    %v162 = vmul.f32 %v92, %v92
    %v163 = vmul.f32 %v94, %v94
    %v164 = vmul.f32 %v96, %v96
    %v165 = vmul.f32 %v98, %v98
    %v166 = vmul.f32 %v100, %v100
    %v167 = vmul.f32 %v102, %v102
    %v168 = vmul.f32 %v104, %v104
    %v169 = vmul.f32 %v106, %v106
    %v170 = vmul.f32 %v108, %v108
    %v171 = vmul.f32 %v110, %v110
    %v172 = vmul.f32 %v112, %v112
    %v173 = vmul.f32 %v114, %v114
    %v174 = vmul.f32 %v116, %v116
    %v175 = vmul.f32 %v118, %v118
    %vm176 = vcmask 7168
    %v177 = vsel %vm176, %v160, 0.0
    %v178 = vsel %vm176, %v161, 0.0
    %v179 = vadd.f32 %v177, %v178
    %v180 = vsel %vm176, %v162, 0.0
    %v181 = vadd.f32 %v179, %v180
    %v182 = vsel %vm176, %v163, 0.0
    %v183 = vadd.f32 %v181, %v182
    %v184 = vsel %vm176, %v164, 0.0
    %v185 = vadd.f32 %v183, %v184
    %v186 = vsel %vm176, %v165, 0.0
    %v187 = vadd.f32 %v185, %v186
    %v188 = vsel %vm176, %v166, 0.0
    %v189 = vadd.f32 %v187, %v188
    %v190 = vsel %vm176, %v167, 0.0
    %v191 = vadd.f32 %v189, %v190
    %v192 = vsel %vm176, %v168, 0.0
    %v193 = vadd.f32 %v191, %v192
    %v194 = vsel %vm176, %v169, 0.0
    %v195 = vadd.f32 %v193, %v194
    %v196 = vsel %vm176, %v170, 0.0
    %v197 = vadd.f32 %v195, %v196
    %v198 = vsel %vm176, %v171, 0.0
    %v199 = vadd.f32 %v197, %v198
    %v200 = vsel %vm176, %v172, 0.0
    %v201 = vadd.f32 %v199, %v200
    %v202 = vsel %vm176, %v173, 0.0
    %v203 = vadd.f32 %v201, %v202
    %v204 = vsel %vm176, %v174, 0.0
    %v205 = vadd.f32 %v203, %v204
    %v206 = vsel %vm176, %v175, 0.0
    %v207 = vadd.f32 %v205, %v206
    %208 = vadd.xlane.f32.xlu0 %v207
    %v209 = vpop.xlane.xlu0 %208
    %v210 = vrot.slane %v209, 4
    %v211 = vadd.f32 %v209, %v210
    %v212 = vrot.slane %v211, 2
    %v213 = vadd.f32 %v211, %v212
    %v214 = vrot.slane %v213, 1
    %v215 = vadd.f32 %v213, %v214
    %s216 = vtos %v215
    %v217 = vstv %s216
    %v218 = vadd.f32 %v159, %v217
    %vm219 = vcmask 0
    %220 = vst.msk [vmem:[#allocation4] sm:$0x1] %vm219, %v218
    // Predicated region
    $region26: #{tpu_custom_call.1} parent=1 // pred_check
      %p221 = pneg %p35
    $region27: #{tpu_custom_call.1} parent=1 // pred_check_branch
      %223 = sbr.rel (%p221) target = $region29
    $region28: #{tpu_custom_call.1} parent=1 // pred_region
      %v224 = vld [vmem:[#allocation4] sm:$0x1]
      %v225 = vadd.f32 %v224, 1e-12
      %v226 = vrsqrt.pop %v225
      %v227 = vld [vmem:[#allocation3] sm:$0x1]
      %229 = vset.pattern.permute.xlu0 0
      %230 = vperm.xlu0 %229, %v226
      %v231 = vpop.permute.xlu0 %230
      %v233 = vlaneseq
      %v234 = vshrl.u32 %v233, 7
      %v235 = vsub.s32 0, %v234
      %v236 = vrot.slane %v231, %v235
      %v237 = vmul.f32 %v227, %v236
      %v238 = vmul.f32 %v237, %v237
      %vm239 = vcmask 1040384
      %v240 = vsel %vm239, %v238, 0.0
      %241 = vadd.xlane.f32.xlu0 %v240
      %v242 = vpop.xlane.xlu0 %241
      %v243 = vrot.slane %v242, 4
      %v244 = vadd.f32 %v242, %v243
      %v245 = vrot.slane %v244, 2
      %v246 = vadd.f32 %v244, %v245
      %v247 = vrot.slane %v246, 1
      %v248 = vadd.f32 %v246, %v247
      %s249 = vtos %v248
      %v250 = vstv %s249
      %v251 = vadd.f32 %v250, 1e-12
      %v252 = vrsqrt.pop %v251
      %v253 = vmul.f32 %v237, %v252
      %254 = vst [vmem:[#allocation2] sm:$0x1] %v253
      // Predicated region
      $region30: #{tpu_custom_call.1} parent=28 // pred_check
        %p255 = pneg %p34
      $region31: #{tpu_custom_call.1} parent=28 // pred_check_branch
        %257 = sbr.rel (%p255) target = $region33
      $region32: #{tpu_custom_call.1} parent=28 // pred_region
        %v258 = vmul.f32 %v250, %v252
        %v259 = vld [vmem:[#allocation5] sm:$0x1]
        %v260 = vrcp.pop %v258
        %v261 = vmul.f32 %v259, %v260
        %262 = vst.msk [vmem:[#allocation9] sm:$0x1] %vm219, %v261
        %263 = vst [vmem:[#allocation10] sm:$0x1] %v253
      $region33: #{tpu_custom_call.1} parent=28 // pred_fallthru
        _
    $region29: #{tpu_custom_call.1} parent=1 // pred_fallthru
      _
    // Predicated region
    $region34: #{tpu_custom_call.1} parent=1 // pred_check
      _
    $region35: #{tpu_custom_call.1} parent=1 // pred_check_branch
      %265 = sbr.rel (0) target = $region37
    $region36: #{tpu_custom_call.1} parent=1 // pred_region
      %s267 = ssub.s32 16, 16
      %268 = vsyncadd [#allocation8], %s267
      %s270 = sshll.u32 [#allocation9], 4
      %s271 = int_to_ptr.vmem [resolvable:$true] %s270
      %273 = dma.vmem_to_hbm [thread:$0]  %s271, 16, %s3, [#allocation8]
    $region37: #{tpu_custom_call.1} parent=1 // pred_fallthru
      _
    // Predicated region
    $region38: #{tpu_custom_call.1} parent=1 // pred_check
      _
    $region39: #{tpu_custom_call.1} parent=1 // pred_check_branch
      %275 = sbr.rel (0) target = $region41
    $region40: #{tpu_custom_call.1} parent=1 // pred_region
      %s277 = ssub.s32 16, 16
      %278 = vsyncadd [#allocation11], %s277
      %s280 = sshll.u32 [#allocation10], 4
      %s281 = int_to_ptr.vmem [resolvable:$true] %s280
      %283 = dma.vmem_to_hbm [thread:$0]  %s281, 16, %s4, [#allocation11]
    $region41: #{tpu_custom_call.1} parent=1 // pred_fallthru
      _
    // Predicated region
    $region42: #{tpu_custom_call.1} parent=1 // pred_check
      _
    $region43: #{tpu_custom_call.1} parent=1 // pred_check_branch
      %285 = sbr.rel (0) target = $region45
    $region44: #{tpu_custom_call.1} parent=1 // pred_region
      %286 = dma.done [#allocation8], 16
    $region45: #{tpu_custom_call.1} parent=1 // pred_fallthru
      _
    // Predicated region
    $region46: #{tpu_custom_call.1} parent=1 // pred_check
      _
    $region47: #{tpu_custom_call.1} parent=1 // pred_check_branch
      %288 = sbr.rel (0) target = $region49
    $region48: #{tpu_custom_call.1} parent=1 // pred_region
      %289 = dma.done [#allocation11], 16
    $region49: #{tpu_custom_call.1} parent=1 // pred_fallthru
      _
    %290 = vsyncpa [#allocation7], 1
    %291 = vsyncpa [#allocation8], 1
    %292 = vsyncpa [#allocation11], 1

</llo_original>
